<compile_context>
chip_gen: v7x
topology: tpu7x:2x2x1
jax: 0.10.0
libtpu: 0.0.40
codegen_flags: <defaults>
</compile_context>

<pallas_src>
import functools

import jax
import jax.numpy as jnp
from jax.experimental import pallas as pl
from jax.experimental.pallas import tpu as pltpu


def _round_up(n, m):
    return ((n + m - 1) // m) * m


def dann_discriminator_kernel(
    x_ref, w1_ref, b1_ref, w2_ref, b2_ref, w34_ref, b34_ref,
    sig_ref, dis_ref, *, output_size,
):
    """Fused 4-layer MLP hot path for one batch tile.

    w34/b34 are the layer3|layer4 weights fused along the output dim and
    zero-padded to 128 lanes (VMEM-only padding); the two logical results are
    sliced out of the fused logits and stored to two narrow outputs.
    """
    x = x_ref[...].astype(jnp.bfloat16)

    h1 = jnp.dot(x, w1_ref[...], preferred_element_type=jnp.float32) + b1_ref[...]
    h1 = jnp.maximum(h1, 0.0).astype(jnp.bfloat16)

    h2 = jnp.dot(h1, w2_ref[...], preferred_element_type=jnp.float32) + b2_ref[...]
    h2 = jnp.maximum(h2, 0.0).astype(jnp.bfloat16)

    # Single fused matmul for layer3 + layer4.
    logits = jnp.dot(h2, w34_ref[...], preferred_element_type=jnp.float32) + b34_ref[...]

    # TODO(synk): original PyTorch references self.drop_layer3 which is never
    # defined in __init__ (would raise AttributeError); treated as identity here.
    sig_ref[...] = jax.nn.sigmoid(logits[:, :output_size])                    # layer3
    dis_ref[...] = jnp.maximum(logits[:, output_size:output_size + 1], 0.0)   # layer4


def prepare_params(params):
    """One-time (weight-load-time) preprocessing: bf16 casts + layer3/4 fusion.

    Keeps this XLA work out of the per-call forward path.
    """
    hidden_dim = params["w1"].shape[1]
    output_size = params["w3"].shape[1]
    n_fused = output_size + 1
    n_pad = _round_up(n_fused, 128)          # lane-aligned fused matmul width (VMEM only)

    w34 = jnp.zeros((hidden_dim, n_pad), jnp.bfloat16)
    w34 = w34.at[:, :output_size].set(params["w3"].astype(jnp.bfloat16))
    w34 = w34.at[:, output_size:n_fused].set(params["w4"].astype(jnp.bfloat16))
    b34 = jnp.zeros((1, n_pad), jnp.float32)
    b34 = b34.at[:, :output_size].set(params["b3"].astype(jnp.float32))
    b34 = b34.at[:, output_size:n_fused].set(params["b4"].astype(jnp.float32))

    return {
        "w1": params["w1"].astype(jnp.bfloat16),
        "b1": params["b1"].astype(jnp.float32),
        "w2": params["w2"].astype(jnp.bfloat16),
        "b2": params["b2"].astype(jnp.float32),
        "w34": w34,
        "b34": b34,
    }


def _choose_tile_b(B, tile_b):
    """Sublane-aligned batch tile; keep >= 2 grid steps when B allows (v7x 2 TCs)."""
    tb = _round_up(min(tile_b, B), 8)
    if B > tb:
        return tb                             # already >= 2 grid steps
    if B >= 16:
        return _round_up(pl.cdiv(B, 2), 8)    # split a single tile into 2 parallel steps
    return tb


def dann_discriminator_forward(x, prepared, *, output_size, tile_b=1024):
    """x: (B, feature_dim) f32, prepared: output of prepare_params().

    Returns (dis_feature_outputs (B,1), outputs (B,output_size)) in the
    PyTorch module's return order.
    """
    B, feature_dim = x.shape

    tb = _choose_tile_b(B, tile_b)
    grid = (pl.cdiv(B, tb),)                  # no wrapper-side padding of x

    vmem = pltpu.MemorySpace.VMEM
    resident = lambda a: pl.BlockSpec(a.shape, lambda i: (0, 0), memory_space=vmem)

    sig, dis = pl.pallas_call(
        functools.partial(dann_discriminator_kernel, output_size=output_size),
        out_shape=(
            jax.ShapeDtypeStruct((B, output_size), jnp.float32),
            jax.ShapeDtypeStruct((B, 1), jnp.float32),
        ),
        grid=grid,
        in_specs=[
            pl.BlockSpec((tb, feature_dim), lambda i: (i, 0), memory_space=vmem),
            resident(prepared["w1"]), resident(prepared["b1"]),
            resident(prepared["w2"]), resident(prepared["b2"]),
            resident(prepared["w34"]), resident(prepared["b34"]),
        ],
        out_specs=(
            pl.BlockSpec((tb, output_size), lambda i: (i, 0), memory_space=vmem),
            pl.BlockSpec((tb, 1), lambda i: (i, 0), memory_space=vmem),
        ),
        compiler_params=pltpu.CompilerParams(
            dimension_semantics=("parallel",),   # v7x: shard batch tiles over 2 TCs
        ),
    )(x, prepared["w1"], prepared["b1"], prepared["w2"], prepared["b2"],
      prepared["w34"], prepared["b34"])

    return dis, sig


def make_params(key, feature_dim, hidden_dim, output_size):
    """Deterministic init matching the module's __init__:
       weights 1-3 ~ N(0, 0.01), weight 4 ~ N(0, 0.3), biases = 0.
       Stored as (in_dim, out_dim) = transpose of PyTorch's (out, in)."""
    k1, k2, k3, k4 = jax.random.split(key, 4)
    return {
        "w1": 0.01 * jax.random.normal(k1, (feature_dim, hidden_dim), jnp.float32),
        "b1": jnp.zeros((1, hidden_dim), jnp.float32),
        "w2": 0.01 * jax.random.normal(k2, (hidden_dim, hidden_dim), jnp.float32),
        "b2": jnp.zeros((1, hidden_dim), jnp.float32),
        "w3": 0.01 * jax.random.normal(k3, (hidden_dim, output_size), jnp.float32),
        "b3": jnp.zeros((1, output_size), jnp.float32),
        "w4": 0.3 * jax.random.normal(k4, (hidden_dim, 1), jnp.float32),
        "b4": jnp.zeros((1, 1), jnp.float32),
    }


def reference_forward(x, p, *, bf16_weights=False):
    cast = (lambda a: a.astype(jnp.bfloat16)) if bf16_weights else (lambda a: a)
    h1 = jnp.maximum(
        jnp.dot(cast(x), cast(p["w1"]), preferred_element_type=jnp.float32) + p["b1"], 0.0)
    h2 = jnp.maximum(
        jnp.dot(cast(h1), cast(p["w2"]), preferred_element_type=jnp.float32) + p["b2"], 0.0)
    out3 = jax.nn.sigmoid(
        jnp.dot(cast(h2), cast(p["w3"]), preferred_element_type=jnp.float32) + p["b3"])
    out4 = jnp.maximum(
        jnp.dot(cast(h2), cast(p["w4"]), preferred_element_type=jnp.float32) + p["b4"], 0.0)
    return out4, out3


if __name__ == "__main__":
    feature_dim, hidden_dim, output_size = 32, 32, 8
    batch = 256          # small but enough to exercise a 2-step parallel batch grid
    tile_b = 128         # -> 2 grid steps, pipelined, weights resident

    key = jax.random.PRNGKey(0)
    kx, kp = jax.random.split(key)
    x = jax.random.normal(kx, (batch, feature_dim), jnp.float32)
    params = make_params(kp, feature_dim, hidden_dim, output_size)

    # One-time preprocessing, hoisted out of the per-call forward path.
    prepared = prepare_params(params)
    fwd = jax.jit(functools.partial(
        dann_discriminator_forward, output_size=output_size, tile_b=tile_b))

    dis_feature_outputs, outputs = fwd(x, prepared)
    jax.block_until_ready((dis_feature_outputs, outputs))

    assert dis_feature_outputs.shape == (batch, 1)
    assert outputs.shape == (batch, output_size)

    # Tight check against a reference using the same bf16 weight cast.
    ref_dis_bf16, ref_out_bf16 = reference_forward(x, params, bf16_weights=True)
    assert jnp.allclose(dis_feature_outputs, ref_dis_bf16, atol=1e-3)
    assert jnp.allclose(outputs, ref_out_bf16, atol=1e-3)

    # Loose check against the full-f32 PyTorch-equivalent reference.
    ref_dis_f32, ref_out_f32 = reference_forward(x, params, bf16_weights=False)
    assert jnp.allclose(dis_feature_outputs, ref_dis_f32, atol=1e-2)
    assert jnp.allclose(outputs, ref_out_f32, atol=1e-2)

    # Ragged batch: no wrapper-side jnp.pad — Pallas masks the last block's writes.
    batch2 = 250
    dis2, out2 = fwd(x[:batch2], prepared)
    jax.block_until_ready((dis2, out2))
    assert dis2.shape == (batch2, 1) and out2.shape == (batch2, output_size)
    assert jnp.allclose(dis2, ref_dis_bf16[:batch2], atol=1e-3)
    assert jnp.allclose(out2, ref_out_bf16[:batch2], atol=1e-3)

    print("KERNEL_OK")
</pallas_src>

<mosaic_0001>
module attributes {stable_mosaic.version = 11 : i64} {
  func.func @dann_discriminator_kernel(%arg0: i32, %arg1: memref<128x32xf32, #tpu.memory_space<vmem>>, %arg2: memref<32x32xbf16, #tpu.memory_space<vmem>>, %arg3: memref<1x32xf32, #tpu.memory_space<vmem>>, %arg4: memref<32x32xbf16, #tpu.memory_space<vmem>>, %arg5: memref<1x32xf32, #tpu.memory_space<vmem>>, %arg6: memref<32x128xbf16, #tpu.memory_space<vmem>>, %arg7: memref<1x128xf32, #tpu.memory_space<vmem>>, %arg8: memref<128x8xf32, #tpu.memory_space<vmem>>, %arg9: memref<128x1xf32, #tpu.memory_space<vmem>>) attributes {dimension_semantics = [#tpu.dimension_semantics<parallel>], iteration_bounds = array<i64: 2>, scalar_prefetch = 0 : i64, scratch_operands = 0 : i64, tpu.core_type = #tpu.core_type<tc>, window_params = [{transform_indices = @transform_0, window_bounds = array<i64: 128, 32>}, {pipeline_mode = #tpu.pipeline_mode<synchronous>, transform_indices = @transform_1, window_bounds = array<i64: 32, 32>}, {pipeline_mode = #tpu.pipeline_mode<synchronous>, transform_indices = @transform_2, window_bounds = array<i64: 1, 32>}, {pipeline_mode = #tpu.pipeline_mode<synchronous>, transform_indices = @transform_3, window_bounds = array<i64: 32, 32>}, {pipeline_mode = #tpu.pipeline_mode<synchronous>, transform_indices = @transform_4, window_bounds = array<i64: 1, 32>}, {pipeline_mode = #tpu.pipeline_mode<synchronous>, transform_indices = @transform_5, window_bounds = array<i64: 32, 128>}, {pipeline_mode = #tpu.pipeline_mode<synchronous>, transform_indices = @transform_6, window_bounds = array<i64: 1, 128>}, {transform_indices = @transform_7, window_bounds = array<i64: 128, 8>}, {transform_indices = @transform_8, window_bounds = array<i64: 128, 1>}]} {
    %c0 = arith.constant 0 : index
    %c0_0 = arith.constant 0 : index
    %0 = vector.load %arg1[%c0, %c0_0] : memref<128x32xf32, #tpu.memory_space<vmem>>, vector<128x32xf32>
    %1 = arith.truncf %0 : vector<128x32xf32> to vector<128x32xbf16>
    %c0_1 = arith.constant 0 : index
    %c0_2 = arith.constant 0 : index
    %2 = vector.load %arg2[%c0_1, %c0_2] : memref<32x32xbf16, #tpu.memory_space<vmem>>, vector<32x32xbf16>
    %cst = arith.constant dense<0.000000e+00> : vector<128x32xf32>
    %3 = tpu.matmul %1, %2, %cst {dimension_numbers = #tpu.dot_dimension_numbers<[1], [0], [0], [1], [0, 0, 1, 1], [], []>} : vector<128x32xbf16>, vector<32x32xbf16>, vector<128x32xf32> -> vector<128x32xf32>
    %c0_3 = arith.constant 0 : index
    %c0_4 = arith.constant 0 : index
    %4 = vector.load %arg3[%c0_3, %c0_4] : memref<1x32xf32, #tpu.memory_space<vmem>>, vector<1x32xf32>
    %5 = vector.broadcast %4 : vector<1x32xf32> to vector<128x32xf32>
    %6 = arith.addf %3, %5 : vector<128x32xf32>
    %cst_5 = arith.constant 0.000000e+00 : f32
    %7 = vector.broadcast %cst_5 : f32 to vector<128x32xf32>
    %8 = arith.maximumf %6, %7 : vector<128x32xf32>
    %9 = arith.truncf %8 : vector<128x32xf32> to vector<128x32xbf16>
    %c0_6 = arith.constant 0 : index
    %c0_7 = arith.constant 0 : index
    %10 = vector.load %arg4[%c0_6, %c0_7] : memref<32x32xbf16, #tpu.memory_space<vmem>>, vector<32x32xbf16>
    %cst_8 = arith.constant dense<0.000000e+00> : vector<128x32xf32>
    %11 = tpu.matmul %9, %10, %cst_8 {dimension_numbers = #tpu.dot_dimension_numbers<[1], [0], [0], [1], [0, 0, 1, 1], [], []>} : vector<128x32xbf16>, vector<32x32xbf16>, vector<128x32xf32> -> vector<128x32xf32>
    %c0_9 = arith.constant 0 : index
    %c0_10 = arith.constant 0 : index
    %12 = vector.load %arg5[%c0_9, %c0_10] : memref<1x32xf32, #tpu.memory_space<vmem>>, vector<1x32xf32>
    %13 = vector.broadcast %12 : vector<1x32xf32> to vector<128x32xf32>
    %14 = arith.addf %11, %13 : vector<128x32xf32>
    %cst_11 = arith.constant 0.000000e+00 : f32
    %15 = vector.broadcast %cst_11 : f32 to vector<128x32xf32>
    %16 = arith.maximumf %14, %15 : vector<128x32xf32>
    %17 = arith.truncf %16 : vector<128x32xf32> to vector<128x32xbf16>
    %c0_12 = arith.constant 0 : index
    %c0_13 = arith.constant 0 : index
    %18 = vector.load %arg6[%c0_12, %c0_13] : memref<32x128xbf16, #tpu.memory_space<vmem>>, vector<32x128xbf16>
    %cst_14 = arith.constant dense<0.000000e+00> : vector<128x128xf32>
    %19 = tpu.matmul %17, %18, %cst_14 {dimension_numbers = #tpu.dot_dimension_numbers<[1], [0], [0], [1], [0, 0, 1, 1], [], []>} : vector<128x32xbf16>, vector<32x128xbf16>, vector<128x128xf32> -> vector<128x128xf32>
    %c0_15 = arith.constant 0 : index
    %c0_16 = arith.constant 0 : index
    %20 = vector.load %arg7[%c0_15, %c0_16] : memref<1x128xf32, #tpu.memory_space<vmem>>, vector<1x128xf32>
    %21 = vector.broadcast %20 : vector<1x128xf32> to vector<128x128xf32>
    %22 = arith.addf %19, %21 : vector<128x128xf32>
    %23 = vector.extract_strided_slice %22 {offsets = [0, 0], sizes = [128, 8], strides = [1, 1]} : vector<128x128xf32> to vector<128x8xf32>
    %24 = arith.negf %23 : vector<128x8xf32>
    %25 = math.exp %24 : vector<128x8xf32>
    %cst_17 = arith.constant 1.000000e+00 : f32
    %26 = vector.broadcast %cst_17 : f32 to vector<128x8xf32>
    %27 = arith.addf %26, %25 : vector<128x8xf32>
    %28 = arith.divf %26, %27 : vector<128x8xf32>
    %c0_18 = arith.constant 0 : index
    %c0_19 = arith.constant 0 : index
    %29 = vector.load %arg8[%c0_18, %c0_19] : memref<128x8xf32, #tpu.memory_space<vmem>>, vector<128x8xf32>
    tpu.vector_store %arg8[%c0_18, %c0_19], %28 {strides = array<i32>} : memref<128x8xf32, #tpu.memory_space<vmem>>, vector<128x8xf32>,
    %30 = vector.extract_strided_slice %22 {offsets = [0, 8], sizes = [128, 1], strides = [1, 1]} : vector<128x128xf32> to vector<128x1xf32>
    %cst_20 = arith.constant 0.000000e+00 : f32
    %31 = vector.broadcast %cst_20 : f32 to vector<128x1xf32>
    %32 = arith.maximumf %30, %31 : vector<128x1xf32>
    %c0_21 = arith.constant 0 : index
    %c0_22 = arith.constant 0 : index
    %33 = vector.load %arg9[%c0_21, %c0_22] : memref<128x1xf32, #tpu.memory_space<vmem>>, vector<128x1xf32>
    tpu.vector_store %arg9[%c0_21, %c0_22], %32 {strides = array<i32>} : memref<128x1xf32, #tpu.memory_space<vmem>>, vector<128x1xf32>,
    return
  }
  func.func @transform_0(%arg0: i32) -> (i32, i32) {
    %c0_i32 = arith.constant 0 : i32
    %c0_i32_0 = arith.constant 0 : i32
    return %arg0, %c0_i32 : i32, i32
  }
  func.func @transform_1(%arg0: i32) -> (i32, i32) {
    %c0_i32 = arith.constant 0 : i32
    %c0_i32_0 = arith.constant 0 : i32
    %c0_i32_1 = arith.constant 0 : i32
    return %c0_i32, %c0_i32_0 : i32, i32
  }
  func.func @transform_2(%arg0: i32) -> (i32, i32) {
    %c0_i32 = arith.constant 0 : i32
    %c0_i32_0 = arith.constant 0 : i32
    %c0_i32_1 = arith.constant 0 : i32
    return %c0_i32, %c0_i32_0 : i32, i32
  }
  func.func @transform_3(%arg0: i32) -> (i32, i32) {
    %c0_i32 = arith.constant 0 : i32
    %c0_i32_0 = arith.constant 0 : i32
    %c0_i32_1 = arith.constant 0 : i32
    return %c0_i32, %c0_i32_0 : i32, i32
  }
  func.func @transform_4(%arg0: i32) -> (i32, i32) {
    %c0_i32 = arith.constant 0 : i32
    %c0_i32_0 = arith.constant 0 : i32
    %c0_i32_1 = arith.constant 0 : i32
    return %c0_i32, %c0_i32_0 : i32, i32
  }
  func.func @transform_5(%arg0: i32) -> (i32, i32) {
    %c0_i32 = arith.constant 0 : i32
    %c0_i32_0 = arith.constant 0 : i32
    %c0_i32_1 = arith.constant 0 : i32
    return %c0_i32, %c0_i32_0 : i32, i32
  }
  func.func @transform_6(%arg0: i32) -> (i32, i32) {
    %c0_i32 = arith.constant 0 : i32
    %c0_i32_0 = arith.constant 0 : i32
    %c0_i32_1 = arith.constant 0 : i32
    return %c0_i32, %c0_i32_0 : i32, i32
  }
  func.func @transform_7(%arg0: i32) -> (i32, i32) {
    %c0_i32 = arith.constant 0 : i32
    %c0_i32_0 = arith.constant 0 : i32
    return %arg0, %c0_i32 : i32, i32
  }
  func.func @transform_8(%arg0: i32) -> (i32, i32) {
    %c0_i32 = arith.constant 0 : i32
    %c0_i32_0 = arith.constant 0 : i32
    return %arg0, %c0_i32 : i32, i32
  }
}

</mosaic_0001>

<llo_original>
// kernel: dann_discriminator_forward.1
$region0: #{dann_discriminator_forward.1}
  #allocation0 [shape = 'u32[]', space=smem, size = 0x4, offset = 0x4, fixed_abs, tag = 'smem constant byte address 0x4 - core index']
  #allocation1 [shape = 'u32[144,128]{1,0:T(1,128)}', space=vmem, size = 0x12000, scoped, tag = 'internal scratch']
  %s0 = inlined_call_operand.vmem [shape: f32[256,32], index: 0, kind: input, shape index: {}]
  %s1 = inlined_call_operand.vmem [shape: bf16[32,32], index: 1, kind: input, shape index: {}]
  %s2 = inlined_call_operand.vmem [shape: f32[1,32], index: 2, kind: input, shape index: {}]
  %s3 = inlined_call_operand.vmem [shape: bf16[32,32], index: 3, kind: input, shape index: {}]
  %s4 = inlined_call_operand.vmem [shape: f32[1,32], index: 4, kind: input, shape index: {}]
  %s5 = inlined_call_operand.vmem [shape: bf16[32,128], index: 5, kind: input, shape index: {}]
  %s6 = inlined_call_operand.vmem [shape: f32[1,128], index: 6, kind: input, shape index: {}]
  %s7 = inlined_call_operand.vmem [shape: f32[256,8], index: 7, kind: output, shape index: {0}]
  %s8 = inlined_call_operand.vmem [shape: f32[256,1], index: 8, kind: output, shape index: {1}]
  %9 = xla_tuple %s7, %s8
  %s10 = sld [smem:[#allocation0]]
  $region69: #{dann_discriminator_forward.1} parent=0
    _
  %s12 = ssub.s32 1, %s10
  %s13 = scalar_select 0, %s12, %s10
  loop: start=0, step=1, limit=4
  $region2: #{dann_discriminator_forward.1} parent=0 // loop_pre_header
    _
  $region3: #{dann_discriminator_forward.1} parent=0 // loop_header
    %s15 = sphi 0, %s19
    %p16 = scmp.ge.s32.totalorder %s15, 4
    %s25 = sphi 0, %s27
    %s28 = sphi 0, %s25
    %s29 = sphi 0, %s28
    %s45 = sphi 0, %s29
    %s49 = sphi 0, %s49
    %s51 = sphi 0, %s49
    %s52 = sphi 0, %s51
    %s66 = sphi 0, %s52
    %s70 = sphi 0, %s70
    %s72 = sphi 0, %s70
    %s73 = sphi 0, %s72
    %s87 = sphi 0, %s73
    %s91 = sphi 0, %s91
    %s93 = sphi 0, %s91
    %s94 = sphi 0, %s93
    %s108 = sphi 0, %s94
    %s112 = sphi 0, %s112
    %s114 = sphi 0, %s112
    %s115 = sphi 0, %s114
    %s129 = sphi 0, %s115
    %s133 = sphi 0, %s133
    %s135 = sphi 0, %s133
    %s136 = sphi 0, %s135
    %s150 = sphi 0, %s136
    %s154 = sphi 0, %s154
    %s156 = sphi 0, %s154
    %s157 = sphi 0, %s156
    %s171 = sphi 0, %s157
    %s177 = sphi 0, %s179
    %s180 = sphi 0, %s177
    %s181 = sphi 0, %s180
    %s197 = sphi 0, %s181
    %s203 = sphi 0, %s205
    %s206 = sphi 0, %s203
    %s207 = sphi 0, %s206
    %s223 = sphi 0, %s207
  $region4: #{dann_discriminator_forward.1} parent=0 // loop_header_branch
    %18 = sbr.rel (%p16) target = $region8
  $region5: #{dann_discriminator_forward.1} parent=0 // loop_body
    %s20 = ssub.s32 %s15, 1
    %s21 = ssub.s32 %s15, 2
    %s22 = sadd.s32 %s15, 1
    %s23 = ssub.s32 %s15, %s22
    %p24 = scmp.eq.s32.totalorder %s23, 0
    %s26 = sadd.s32 %s25, 1
    %s27 = scalar_select %p24, %s25, %s26
    %p30 = pneg %p24
    %p31 = scmp.eq.s32.totalorder %s15, 1
    %p32 = por %p30, %p31
    %p33 = scmp.ne.s32.totalorder %s25, %s28
    %p34 = scmp.eq.s32.totalorder %s15, 0
    %p35 = por %p33, %p34
    %p36 = scmp.ne.s32.totalorder %s25, %s28
    %p37 = scmp.eq.s32.totalorder %s20, 1
    %p38 = por %p36, %p37
    %p39 = scmp.ne.s32.totalorder %s28, %s29
    %p40 = scmp.eq.s32.totalorder %s20, 0
    %p41 = por %p39, %p40
    %p42 = scmp.ne.s32.totalorder %s28, %s29
    %p43 = scmp.eq.s32.totalorder %s21, 1
    %p44 = por %p42, %p43
    %p46 = scmp.ne.s32.totalorder %s29, %s45
    %p47 = scmp.eq.s32.totalorder %s21, 0
    %p48 = por %p46, %p47
    %s50 = sadd.s32 %s49, 1
    %p53 = scmp.eq.s32.totalorder %s15, 1
    %p54 = scmp.ne.s32.totalorder %s49, %s51
    %p55 = scmp.eq.s32.totalorder %s15, 0
    %p56 = por %p54, %p55
    %p57 = scmp.ne.s32.totalorder %s49, %s51
    %p58 = scmp.eq.s32.totalorder %s20, 1
    %p59 = por %p57, %p58
    %p60 = scmp.ne.s32.totalorder %s51, %s52
    %p61 = scmp.eq.s32.totalorder %s20, 0
    %p62 = por %p60, %p61
    %p63 = scmp.ne.s32.totalorder %s51, %s52
    %p64 = scmp.eq.s32.totalorder %s21, 1
    %p65 = por %p63, %p64
    %p67 = scmp.ne.s32.totalorder %s52, %s66
    %p68 = scmp.eq.s32.totalorder %s21, 0
    %p69 = por %p67, %p68
    %s71 = sadd.s32 %s70, 1
    %p74 = scmp.eq.s32.totalorder %s15, 1
    %p75 = scmp.ne.s32.totalorder %s70, %s72
    %p76 = scmp.eq.s32.totalorder %s15, 0
    %p77 = por %p75, %p76
    %p78 = scmp.ne.s32.totalorder %s70, %s72
    %p79 = scmp.eq.s32.totalorder %s20, 1
    %p80 = por %p78, %p79
    %p81 = scmp.ne.s32.totalorder %s72, %s73
    %p82 = scmp.eq.s32.totalorder %s20, 0
    %p83 = por %p81, %p82
    %p84 = scmp.ne.s32.totalorder %s72, %s73
    %p85 = scmp.eq.s32.totalorder %s21, 1
    %p86 = por %p84, %p85
    %p88 = scmp.ne.s32.totalorder %s73, %s87
    %p89 = scmp.eq.s32.totalorder %s21, 0
    %p90 = por %p88, %p89
    %s92 = sadd.s32 %s91, 1
    %p95 = scmp.eq.s32.totalorder %s15, 1
    %p96 = scmp.ne.s32.totalorder %s91, %s93
    %p97 = scmp.eq.s32.totalorder %s15, 0
    %p98 = por %p96, %p97
    %p99 = scmp.ne.s32.totalorder %s91, %s93
    %p100 = scmp.eq.s32.totalorder %s20, 1
    %p101 = por %p99, %p100
    %p102 = scmp.ne.s32.totalorder %s93, %s94
    %p103 = scmp.eq.s32.totalorder %s20, 0
    %p104 = por %p102, %p103
    %p105 = scmp.ne.s32.totalorder %s93, %s94
    %p106 = scmp.eq.s32.totalorder %s21, 1
    %p107 = por %p105, %p106
    %p109 = scmp.ne.s32.totalorder %s94, %s108
    %p110 = scmp.eq.s32.totalorder %s21, 0
    %p111 = por %p109, %p110
    %s113 = sadd.s32 %s112, 1
    %p116 = scmp.eq.s32.totalorder %s15, 1
    %p117 = scmp.ne.s32.totalorder %s112, %s114
    %p118 = scmp.eq.s32.totalorder %s15, 0
    %p119 = por %p117, %p118
    %p120 = scmp.ne.s32.totalorder %s112, %s114
    %p121 = scmp.eq.s32.totalorder %s20, 1
    %p122 = por %p120, %p121
    %p123 = scmp.ne.s32.totalorder %s114, %s115
    %p124 = scmp.eq.s32.totalorder %s20, 0
    %p125 = por %p123, %p124
    %p126 = scmp.ne.s32.totalorder %s114, %s115
    %p127 = scmp.eq.s32.totalorder %s21, 1
    %p128 = por %p126, %p127
    %p130 = scmp.ne.s32.totalorder %s115, %s129
    %p131 = scmp.eq.s32.totalorder %s21, 0
    %p132 = por %p130, %p131
    %s134 = sadd.s32 %s133, 1
    %p137 = scmp.eq.s32.totalorder %s15, 1
    %p138 = scmp.ne.s32.totalorder %s133, %s135
    %p139 = scmp.eq.s32.totalorder %s15, 0
    %p140 = por %p138, %p139
    %p141 = scmp.ne.s32.totalorder %s133, %s135
    %p142 = scmp.eq.s32.totalorder %s20, 1
    %p143 = por %p141, %p142
    %p144 = scmp.ne.s32.totalorder %s135, %s136
    %p145 = scmp.eq.s32.totalorder %s20, 0
    %p146 = por %p144, %p145
    %p147 = scmp.ne.s32.totalorder %s135, %s136
    %p148 = scmp.eq.s32.totalorder %s21, 1
    %p149 = por %p147, %p148
    %p151 = scmp.ne.s32.totalorder %s136, %s150
    %p152 = scmp.eq.s32.totalorder %s21, 0
    %p153 = por %p151, %p152
    %s155 = sadd.s32 %s154, 1
    %p158 = scmp.eq.s32.totalorder %s15, 1
    %p159 = scmp.ne.s32.totalorder %s154, %s156
    %p160 = scmp.eq.s32.totalorder %s15, 0
    %p161 = por %p159, %p160
    %p162 = scmp.ne.s32.totalorder %s154, %s156
    %p163 = scmp.eq.s32.totalorder %s20, 1
    %p164 = por %p162, %p163
    %p165 = scmp.ne.s32.totalorder %s156, %s157
    %p166 = scmp.eq.s32.totalorder %s20, 0
    %p167 = por %p165, %p166
    %p168 = scmp.ne.s32.totalorder %s156, %s157
    %p169 = scmp.eq.s32.totalorder %s21, 1
    %p170 = por %p168, %p169
    %p172 = scmp.ne.s32.totalorder %s157, %s171
    %p173 = scmp.eq.s32.totalorder %s21, 0
    %p174 = por %p172, %p173
    %s175 = ssub.s32 %s15, %s22
    %p176 = scmp.eq.s32.totalorder %s175, 0
    %s178 = sadd.s32 %s177, 1
    %s179 = scalar_select %p176, %s177, %s178
    %p182 = pneg %p176
    %p183 = scmp.eq.s32.totalorder %s15, 1
    %p184 = por %p182, %p183
    %p185 = scmp.ne.s32.totalorder %s177, %s180
    %p186 = scmp.eq.s32.totalorder %s15, 0
    %p187 = por %p185, %p186
    %p188 = scmp.ne.s32.totalorder %s177, %s180
    %p189 = scmp.eq.s32.totalorder %s20, 1
    %p190 = por %p188, %p189
    %p191 = scmp.ne.s32.totalorder %s180, %s181
    %p192 = scmp.eq.s32.totalorder %s20, 0
    %p193 = por %p191, %p192
    %p194 = scmp.ne.s32.totalorder %s180, %s181
    %p195 = scmp.eq.s32.totalorder %s21, 1
    %p196 = por %p194, %p195
    %p198 = scmp.ne.s32.totalorder %s181, %s197
    %p199 = scmp.eq.s32.totalorder %s21, 0
    %p200 = por %p198, %p199
    %s201 = ssub.s32 %s15, %s22
    %p202 = scmp.eq.s32.totalorder %s201, 0
    %s204 = sadd.s32 %s203, 1
    %s205 = scalar_select %p202, %s203, %s204
    %p208 = pneg %p202
    %p209 = scmp.eq.s32.totalorder %s15, 1
    %p210 = por %p208, %p209
    %p211 = scmp.ne.s32.totalorder %s203, %s206
    %p212 = scmp.eq.s32.totalorder %s15, 0
    %p213 = por %p211, %p212
    %p214 = scmp.ne.s32.totalorder %s203, %s206
    %p215 = scmp.eq.s32.totalorder %s20, 1
    %p216 = por %p214, %p215
    %p217 = scmp.ne.s32.totalorder %s206, %s207
    %p218 = scmp.eq.s32.totalorder %s20, 0
    %p219 = por %p217, %p218
    %p220 = scmp.ne.s32.totalorder %s206, %s207
    %p221 = scmp.eq.s32.totalorder %s21, 1
    %p222 = por %p220, %p221
    %p224 = scmp.ne.s32.totalorder %s207, %s223
    %p225 = scmp.eq.s32.totalorder %s21, 0
    %p226 = por %p224, %p225
    %p227 = scmp.le.s32.totalorder 1, %s15
    %p228 = scmp.lt.s32.totalorder %s15, 3
    %p229 = pnand %p227, %p228
    %p230 = pneg %p229
    // Predicated region
    $region9: #{dann_discriminator_forward.1} parent=5 // pred_check
      _
    $region10: #{dann_discriminator_forward.1} parent=5 // pred_check_branch
      %232 = sbr.rel (%p229) target = $region12
    $region11: #{dann_discriminator_forward.1} parent=5 // pred_region
      %s233 = ssub.s32 %s15, 1
      // Predicated region
      $region13: #{dann_discriminator_forward.1} parent=11 // pred_check
        %p234 = pneg %p62
      $region14: #{dann_discriminator_forward.1} parent=11 // pred_check_branch
        %236 = sbr.rel (%p234) target = $region16
      $region15: #{dann_discriminator_forward.1} parent=11 // pred_region
        _
      $region16: #{dann_discriminator_forward.1} parent=11 // pred_fallthru
        _
      // Predicated region
      $region17: #{dann_discriminator_forward.1} parent=11 // pred_check
        %p237 = pneg %p83
      $region18: #{dann_discriminator_forward.1} parent=11 // pred_check_branch
        %239 = sbr.rel (%p237) target = $region20
      $region19: #{dann_discriminator_forward.1} parent=11 // pred_region
        _
      $region20: #{dann_discriminator_forward.1} parent=11 // pred_fallthru
        _
      // Predicated region
      $region21: #{dann_discriminator_forward.1} parent=11 // pred_check
        %p240 = pneg %p104
      $region22: #{dann_discriminator_forward.1} parent=11 // pred_check_branch
        %242 = sbr.rel (%p240) target = $region24
      $region23: #{dann_discriminator_forward.1} parent=11 // pred_region
        _
      $region24: #{dann_discriminator_forward.1} parent=11 // pred_fallthru
        _
      // Predicated region
      $region25: #{dann_discriminator_forward.1} parent=11 // pred_check
        %p243 = pneg %p125
      $region26: #{dann_discriminator_forward.1} parent=11 // pred_check_branch
        %245 = sbr.rel (%p243) target = $region28
      $region27: #{dann_discriminator_forward.1} parent=11 // pred_region
        _
      $region28: #{dann_discriminator_forward.1} parent=11 // pred_fallthru
        _
      // Predicated region
      $region29: #{dann_discriminator_forward.1} parent=11 // pred_check
        %p246 = pneg %p146
      $region30: #{dann_discriminator_forward.1} parent=11 // pred_check_branch
        %248 = sbr.rel (%p246) target = $region32
      $region31: #{dann_discriminator_forward.1} parent=11 // pred_region
        _
      $region32: #{dann_discriminator_forward.1} parent=11 // pred_fallthru
        _
      // Predicated region
      $region33: #{dann_discriminator_forward.1} parent=11 // pred_check
        %p249 = pneg %p167
      $region34: #{dann_discriminator_forward.1} parent=11 // pred_check_branch
        %251 = sbr.rel (%p249) target = $region36
      $region35: #{dann_discriminator_forward.1} parent=11 // pred_region
        _
      $region36: #{dann_discriminator_forward.1} parent=11 // pred_fallthru
        _
    $region12: #{dann_discriminator_forward.1} parent=5 // pred_fallthru
      _
    %p252 = scmp.lt.s32.totalorder %s15, 2
    // Predicated region
    $region37: #{dann_discriminator_forward.1} parent=5 // pred_check
      %p253 = pneg %p252
    $region38: #{dann_discriminator_forward.1} parent=5 // pred_check_branch
      %255 = sbr.rel (%p253) target = $region40
    $region39: #{dann_discriminator_forward.1} parent=5 // pred_region
      // Predicated region
      $region41: #{dann_discriminator_forward.1} parent=39 // pred_check
        %p256 = pneg %p35
      $region42: #{dann_discriminator_forward.1} parent=39 // pred_check_branch
        %258 = sbr.rel (%p256) target = $region44
      $region43: #{dann_discriminator_forward.1} parent=39 // pred_region
        %s259 = smul.u32 16, %s15
        %p260 = scmp.lt.s32.totalorder %s259, 31
        %s261 = scalar_select %p260, %s259, 31
        %s262 = smul.addr %s261, 8
        %s263 = scalar_lea.vmem %s0, %s262
        %s264 = smul.u32 16, %s15
      $region44: #{dann_discriminator_forward.1} parent=39 // pred_fallthru
        _
    $region40: #{dann_discriminator_forward.1} parent=5 // pred_fallthru
      _
    %p265 = scmp.le.s32.totalorder 1, %s15
    %p266 = scmp.lt.s32.totalorder %s15, 3
    %p267 = pnand %p265, %p266
    %p268 = pneg %p267
    // Predicated region
    $region45: #{dann_discriminator_forward.1} parent=5 // pred_check
      _
    $region46: #{dann_discriminator_forward.1} parent=5 // pred_check_branch
      %270 = sbr.rel (%p267) target = $region48
    $region47: #{dann_discriminator_forward.1} parent=5 // pred_region
      %s271 = ssub.s32 %s15, 1
      %s272 = smul.u32 16, %s20
      %p273 = scmp.lt.s32.totalorder %s272, 31
      %s274 = scalar_select %p273, %s272, 31
      %s275 = smul.addr %s274, 8
      %s276 = scalar_lea.vmem %s0, %s275
      %p277 = pneg %p41
      %p278 = pneg %p38
      %p279 = pneg %p62
      %p280 = pneg %p59
      %p281 = pneg %p83
      %p282 = pneg %p80
      %p283 = pneg %p104
      %p284 = pneg %p101
      %p285 = pneg %p125
      %p286 = pneg %p122
      %p287 = pneg %p146
      %p288 = pneg %p143
      %p289 = pneg %p167
      %p290 = pneg %p164
      %p291 = pneg %p193
      %p292 = pneg %p190
      %s293 = smul.u32 16, %s20
      %p294 = scmp.lt.s32.totalorder %s293, 31
      %s295 = scalar_select %p294, %s293, 31
      %s296 = smul.addr %s295, 8
      %s297 = scalar_lea.vmem %s7, %s296
      %p298 = pneg %p219
      %p299 = pneg %p216
      %s300 = smul.u32 16, %s20
      %p301 = scmp.lt.s32.totalorder %s300, 31
      %s302 = scalar_select %p301, %s300, 31
      %s303 = smul.addr %s302, 8
      %s304 = scalar_lea.vmem %s8, %s303
      %s305 = smul.u32 16, %s20
      %p306 = scmp.lt.s32.totalorder %s305, 31
      %s307 = scalar_select %p306, %s305, 31
      %s308 = smul.addr %s307, 8
      %s309 = scalar_lea.vmem %s0, %s308
      %s310 = smul.u32 16, %s20
      %s311 = smul.u32 16, %s20
      %p312 = scmp.lt.s32.totalorder %s311, 31
      %s313 = scalar_select %p312, %s311, 31
      %s314 = smul.addr %s313, 8
      %s315 = scalar_lea.vmem %s7, %s314
      %s316 = smul.u32 16, %s20
      %s317 = smul.u32 16, %s20
      %p318 = scmp.lt.s32.totalorder %s317, 31
      %s319 = scalar_select %p318, %s317, 31
      %s320 = smul.addr %s319, 8
      %s321 = scalar_lea.vmem %s8, %s320
      %s322 = smul.u32 16, %s20
      %v324 = vld [vmem:[%s309] sm:$0xff]
      %v325 = vld [vmem:[%s309 + $0x8] sm:$0xff]
      %v326 = vld [vmem:[%s309 + $0x10] sm:$0xff]
      %v327 = vld [vmem:[%s309 + $0x18] sm:$0xff]
      %v328 = vld [vmem:[%s309 + $0x20] sm:$0xff]
      %v329 = vld [vmem:[%s309 + $0x28] sm:$0xff]
      %v330 = vld [vmem:[%s309 + $0x30] sm:$0xff]
      %v331 = vld [vmem:[%s309 + $0x38] sm:$0xff]
      %v332 = vld [vmem:[%s309 + $0x40] sm:$0xff]
      %v333 = vld [vmem:[%s309 + $0x48] sm:$0xff]
      %v334 = vld [vmem:[%s309 + $0x50] sm:$0xff]
      %v335 = vld [vmem:[%s309 + $0x58] sm:$0xff]
      %v336 = vld [vmem:[%s309 + $0x60] sm:$0xff]
      %v337 = vld [vmem:[%s309 + $0x68] sm:$0xff]
      %v338 = vld [vmem:[%s309 + $0x70] sm:$0xff]
      %v339 = vld [vmem:[%s309 + $0x78] sm:$0xff]
      %v340 = vpack.c.bf16 %v325, %v324
      %v341 = vpack.c.bf16 %v327, %v326
      %v342 = vpack.c.bf16 %v329, %v328
      %v343 = vpack.c.bf16 %v331, %v330
      %v344 = vpack.c.bf16 %v333, %v332
      %v345 = vpack.c.bf16 %v335, %v334
      %v346 = vpack.c.bf16 %v337, %v336
      %v347 = vpack.c.bf16 %v339, %v338
      %v348 = vld [vmem:[%s1] sm:$0xf]
      %v349 = vld [vmem:[%s1 + $0x4] sm:$0xf]
      %v350 = vld [vmem:[%s1 + $0x8] sm:$0xf]
      %v351 = vld [vmem:[%s1 + $0xc] sm:$0xf]
      %v352 = vld [vmem:[%s2] sm:$0x1]
      %v354 = vlaneseq
      %v355 = vshrl.u32 %v354, 7
      %v356 = vsub.s32 0, %v355
      %v357 = vrot.slane %v352, %v356
      %v363 = vunpack.c.l.b16 %v348
      %v364 = vunpack.c.l.b16 %v349
      %v365 = vunpack.c.l.b16 %v350
      %v366 = vunpack.c.l.b16 %v351
      %v367 = vpack.c.b16 %v364, %v363
      %v368 = vpack.c.b16 %v366, %v365
      %vm371 = vcmask 261120
      %v373 = vsel %vm371, %v340, 0
      %v376 = vsel %vm371, %v341, 0
      %v379 = vsel %vm371, %v342, 0
      %v382 = vsel %vm371, %v343, 0
      %v385 = vsel %vm371, %v344, 0
      %v388 = vsel %vm371, %v345, 0
      %v391 = vsel %vm371, %v346, 0
      %v394 = vsel %vm371, %v347, 0
      %396 = vmatprep.subr.bf16.mxu0 0
      %397 = vmatpush1.bf16.msra.mxu0 %v367
      %398 = vmatprep.subr.bf16.mxu0 0
      %399 = vmatpush1.bf16.msra.mxu0 %v368
      %400 = vmatprep.subr.bf16.mxu0 0
      %401 = vmatpush1.bf16.msra.mxu0 0
      %402 = vmatprep.subr.bf16.mxu0 0
      %403 = vmatpush1.bf16.msra.mxu0 0
      %404 = vmatprep.subr.bf16.mxu0 0
      %405 = vmatpush1.bf16.msra.mxu0 0
      %406 = vmatprep.subr.bf16.mxu0 0
      %407 = vmatpush1.bf16.msra.mxu0 0
      %408 = vmatprep.subr.bf16.mxu0 0
      %409 = vmatpush1.bf16.msra.mxu0 0
      %410 = vmatprep.subr.bf16.mxu0 0
      %411 = vmatpush1.bf16.msra.mxu0 0
      %412 = vmatprep.subr.bf16.mxu0 0
      %413 = vmatpush1.bf16.msra.mxu0 0
      %414 = vmatprep.subr.bf16.mxu0 0
      %415 = vmatpush1.bf16.msra.mxu0 0
      %416 = vmatprep.subr.bf16.mxu0 0
      %417 = vmatpush1.bf16.msra.mxu0 0
      %418 = vmatprep.subr.bf16.mxu0 0
      %419 = vmatpush1.bf16.msra.mxu0 0
      %420 = vmatprep.subr.bf16.mxu0 0
      %421 = vmatpush1.bf16.msra.mxu0 0
      %422 = vmatprep.subr.bf16.mxu0 0
      %423 = vmatpush1.bf16.msra.mxu0 0
      %424 = vmatprep.subr.bf16.mxu0 0
      %425 = vmatpush1.bf16.msra.mxu0 0
      %426 = vmatprep.subr.bf16.mxu0 0
      %427 = vmatpush1.bf16.msra.mxu0 0
      %428 = vmatprep.mubr.bf16.mxu0 0
      %429 = vmatmul.mubr.bf16.gmra.mrb[0].mxu0 %v373
      %v430 = vpop.f32.mrb[0].mxu0
      %v431 = vadd.f32 %v357, %v430
      %v432 = vpop.f32.mrb[0].mxu0
      %v433 = vpop.f32.mrb[0].mxu0
      %v434 = vadd.f32 %v357, %v433
      %v435 = vpop.f32.mrb[0].mxu0
      %436 = vmatprep.mubr.bf16.mxu0 0
      %437 = vmatmul.mubr.bf16.gmra.mrb[0].mxu0 %v376
      %v438 = vpop.f32.mrb[0].mxu0
      %v439 = vadd.f32 %v357, %v438
      %v440 = vpop.f32.mrb[0].mxu0
      %v441 = vpop.f32.mrb[0].mxu0
      %v442 = vadd.f32 %v357, %v441
      %v443 = vpop.f32.mrb[0].mxu0
      %444 = vmatprep.mubr.bf16.mxu0 0
      %445 = vmatmul.mubr.bf16.gmra.mrb[0].mxu0 %v379
      %v446 = vpop.f32.mrb[0].mxu0
      %v447 = vadd.f32 %v357, %v446
      %v448 = vpop.f32.mrb[0].mxu0
      %v449 = vpop.f32.mrb[0].mxu0
      %v450 = vadd.f32 %v357, %v449
      %v451 = vpop.f32.mrb[0].mxu0
      %452 = vmatprep.mubr.bf16.mxu0 0
      %453 = vmatmul.mubr.bf16.gmra.mrb[0].mxu0 %v382
      %v454 = vpop.f32.mrb[0].mxu0
      %v455 = vadd.f32 %v357, %v454
      %v456 = vpop.f32.mrb[0].mxu0
      %v457 = vpop.f32.mrb[0].mxu0
      %v458 = vadd.f32 %v357, %v457
      %v459 = vpop.f32.mrb[0].mxu0
      %460 = vmatprep.mubr.bf16.mxu0 0
      %461 = vmatmul.mubr.bf16.gmra.mrb[0].mxu0 %v385
      %v462 = vpop.f32.mrb[0].mxu0
      %v463 = vadd.f32 %v357, %v462
      %v464 = vpop.f32.mrb[0].mxu0
      %v465 = vpop.f32.mrb[0].mxu0
      %v466 = vadd.f32 %v357, %v465
      %v467 = vpop.f32.mrb[0].mxu0
      %468 = vmatprep.mubr.bf16.mxu0 0
      %469 = vmatmul.mubr.bf16.gmra.mrb[0].mxu0 %v388
      %v470 = vpop.f32.mrb[0].mxu0
      %v471 = vadd.f32 %v357, %v470
      %v472 = vpop.f32.mrb[0].mxu0
      %v473 = vpop.f32.mrb[0].mxu0
      %v474 = vadd.f32 %v357, %v473
      %v475 = vpop.f32.mrb[0].mxu0
      %476 = vmatprep.mubr.bf16.mxu0 0
      %477 = vmatmul.mubr.bf16.gmra.mrb[0].mxu0 %v391
      %v478 = vpop.f32.mrb[0].mxu0
      %v479 = vadd.f32 %v357, %v478
      %v480 = vpop.f32.mrb[0].mxu0
      %v481 = vpop.f32.mrb[0].mxu0
      %v482 = vadd.f32 %v357, %v481
      %v483 = vpop.f32.mrb[0].mxu0
      %484 = vmatprep.mubr.bf16.mxu0 0
      %485 = vmatmul.mubr.bf16.gmra.mrb[0].mxu0 %v394
      %v486 = vpop.f32.mrb[0].mxu0
      %v487 = vadd.f32 %v357, %v486
      %v488 = vpop.f32.mrb[0].mxu0
      %v489 = vpop.f32.mrb[0].mxu0
      %v490 = vadd.f32 %v357, %v489
      %v491 = vpop.f32.mrb[0].mxu0
      %492 = vdwg.mxu0
      %v493 = vmax.f32 %v431, 0.0
      %v494 = vmax.f32 %v434, 0.0
      %v495 = vmax.f32 %v439, 0.0
      %v496 = vmax.f32 %v442, 0.0
      %v497 = vmax.f32 %v447, 0.0
      %v498 = vmax.f32 %v450, 0.0
      %v499 = vmax.f32 %v455, 0.0
      %v500 = vmax.f32 %v458, 0.0
      %v501 = vmax.f32 %v463, 0.0
      %v502 = vmax.f32 %v466, 0.0
      %v503 = vmax.f32 %v471, 0.0
      %v504 = vmax.f32 %v474, 0.0
      %v505 = vmax.f32 %v479, 0.0
      %v506 = vmax.f32 %v482, 0.0
      %v507 = vmax.f32 %v487, 0.0
      %v508 = vmax.f32 %v490, 0.0
      %v509 = vpack.c.bf16 %v494, %v493
      %v510 = vpack.c.bf16 %v496, %v495
      %v511 = vpack.c.bf16 %v498, %v497
      %v512 = vpack.c.bf16 %v500, %v499
      %v513 = vpack.c.bf16 %v502, %v501
      %v514 = vpack.c.bf16 %v504, %v503
      %v515 = vpack.c.bf16 %v506, %v505
      %v516 = vpack.c.bf16 %v508, %v507
      %v517 = vld [vmem:[%s3] sm:$0xf]
      %v518 = vld [vmem:[%s3 + $0x4] sm:$0xf]
      %v519 = vld [vmem:[%s3 + $0x8] sm:$0xf]
      %v520 = vld [vmem:[%s3 + $0xc] sm:$0xf]
      %v521 = vld [vmem:[%s4] sm:$0x1]
      %v523 = vlaneseq
      %v524 = vshrl.u32 %v523, 7
      %v525 = vsub.s32 0, %v524
      %v526 = vrot.slane %v521, %v525
      %v532 = vunpack.c.l.b16 %v517
      %v533 = vunpack.c.l.b16 %v518
      %v534 = vunpack.c.l.b16 %v519
      %v535 = vunpack.c.l.b16 %v520
      %v536 = vpack.c.b16 %v533, %v532
      %v537 = vpack.c.b16 %v535, %v534
      %v541 = vsel %vm371, %v509, 0
      %v544 = vsel %vm371, %v510, 0
      %v547 = vsel %vm371, %v511, 0
      %v550 = vsel %vm371, %v512, 0
      %v553 = vsel %vm371, %v513, 0
      %v556 = vsel %vm371, %v514, 0
      %v559 = vsel %vm371, %v515, 0
      %v562 = vsel %vm371, %v516, 0
      %564 = vmatprep.subr.bf16.mxu0 0
      %565 = vmatpush1.bf16.msra.mxu0 %v536
      %566 = vmatprep.subr.bf16.mxu0 0
      %567 = vmatpush1.bf16.msra.mxu0 %v537
      %568 = vmatprep.subr.bf16.mxu0 0
      %569 = vmatpush1.bf16.msra.mxu0 0
      %570 = vmatprep.subr.bf16.mxu0 0
      %571 = vmatpush1.bf16.msra.mxu0 0
      %572 = vmatprep.subr.bf16.mxu0 0
      %573 = vmatpush1.bf16.msra.mxu0 0
      %574 = vmatprep.subr.bf16.mxu0 0
      %575 = vmatpush1.bf16.msra.mxu0 0
      %576 = vmatprep.subr.bf16.mxu0 0
      %577 = vmatpush1.bf16.msra.mxu0 0
      %578 = vmatprep.subr.bf16.mxu0 0
      %579 = vmatpush1.bf16.msra.mxu0 0
      %580 = vmatprep.subr.bf16.mxu0 0
      %581 = vmatpush1.bf16.msra.mxu0 0
      %582 = vmatprep.subr.bf16.mxu0 0
      %583 = vmatpush1.bf16.msra.mxu0 0
      %584 = vmatprep.subr.bf16.mxu0 0
      %585 = vmatpush1.bf16.msra.mxu0 0
      %586 = vmatprep.subr.bf16.mxu0 0
      %587 = vmatpush1.bf16.msra.mxu0 0
      %588 = vmatprep.subr.bf16.mxu0 0
      %589 = vmatpush1.bf16.msra.mxu0 0
      %590 = vmatprep.subr.bf16.mxu0 0
      %591 = vmatpush1.bf16.msra.mxu0 0
      %592 = vmatprep.subr.bf16.mxu0 0
      %593 = vmatpush1.bf16.msra.mxu0 0
      %594 = vmatprep.subr.bf16.mxu0 0
      %595 = vmatpush1.bf16.msra.mxu0 0
      %596 = vmatprep.mubr.bf16.mxu0 0
      %597 = vmatmul.mubr.bf16.gmra.mrb[0].mxu0 %v541
      %v598 = vpop.f32.mrb[0].mxu0
      %v599 = vadd.f32 %v526, %v598
      %v600 = vpop.f32.mrb[0].mxu0
      %v601 = vpop.f32.mrb[0].mxu0
      %v602 = vadd.f32 %v526, %v601
      %v603 = vpop.f32.mrb[0].mxu0
      %604 = vmatprep.mubr.bf16.mxu0 0
      %605 = vmatmul.mubr.bf16.gmra.mrb[0].mxu0 %v544
      %v606 = vpop.f32.mrb[0].mxu0
      %v607 = vadd.f32 %v526, %v606
      %v608 = vpop.f32.mrb[0].mxu0
      %v609 = vpop.f32.mrb[0].mxu0
      %v610 = vadd.f32 %v526, %v609
      %v611 = vpop.f32.mrb[0].mxu0
      %612 = vmatprep.mubr.bf16.mxu0 0
      %613 = vmatmul.mubr.bf16.gmra.mrb[0].mxu0 %v547
      %v614 = vpop.f32.mrb[0].mxu0
      %v615 = vadd.f32 %v526, %v614
      %v616 = vpop.f32.mrb[0].mxu0
      %v617 = vpop.f32.mrb[0].mxu0
      %v618 = vadd.f32 %v526, %v617
      %v619 = vpop.f32.mrb[0].mxu0
      %620 = vmatprep.mubr.bf16.mxu0 0
      %621 = vmatmul.mubr.bf16.gmra.mrb[0].mxu0 %v550
      %v622 = vpop.f32.mrb[0].mxu0
      %v623 = vadd.f32 %v526, %v622
      %v624 = vpop.f32.mrb[0].mxu0
      %v625 = vpop.f32.mrb[0].mxu0
      %v626 = vadd.f32 %v526, %v625
      %v627 = vpop.f32.mrb[0].mxu0
      %628 = vmatprep.mubr.bf16.mxu0 0
      %629 = vmatmul.mubr.bf16.gmra.mrb[0].mxu0 %v553
      %v630 = vpop.f32.mrb[0].mxu0
      %v631 = vadd.f32 %v526, %v630
      %v632 = vpop.f32.mrb[0].mxu0
      %v633 = vpop.f32.mrb[0].mxu0
      %v634 = vadd.f32 %v526, %v633
      %v635 = vpop.f32.mrb[0].mxu0
      %636 = vmatprep.mubr.bf16.mxu0 0
      %637 = vmatmul.mubr.bf16.gmra.mrb[0].mxu0 %v556
      %v638 = vpop.f32.mrb[0].mxu0
      %v639 = vadd.f32 %v526, %v638
      %v640 = vpop.f32.mrb[0].mxu0
      %v641 = vpop.f32.mrb[0].mxu0
      %v642 = vadd.f32 %v526, %v641
      %v643 = vpop.f32.mrb[0].mxu0
      %644 = vmatprep.mubr.bf16.mxu0 0
      %645 = vmatmul.mubr.bf16.gmra.mrb[0].mxu0 %v559
      %v646 = vpop.f32.mrb[0].mxu0
      %v647 = vadd.f32 %v526, %v646
      %v648 = vpop.f32.mrb[0].mxu0
      %v649 = vpop.f32.mrb[0].mxu0
      %v650 = vadd.f32 %v526, %v649
      %v651 = vpop.f32.mrb[0].mxu0
      %652 = vmatprep.mubr.bf16.mxu0 0
      %653 = vmatmul.mubr.bf16.gmra.mrb[0].mxu0 %v562
      %v654 = vpop.f32.mrb[0].mxu0
      %v655 = vadd.f32 %v526, %v654
      %v656 = vpop.f32.mrb[0].mxu0
      %v657 = vpop.f32.mrb[0].mxu0
      %v658 = vadd.f32 %v526, %v657
      %v659 = vpop.f32.mrb[0].mxu0
      %660 = vdwg.mxu0
      %v661 = vmax.f32 %v599, 0.0
      %v662 = vmax.f32 %v602, 0.0
      %v663 = vmax.f32 %v607, 0.0
      %v664 = vmax.f32 %v610, 0.0
      %v665 = vmax.f32 %v615, 0.0
      %v666 = vmax.f32 %v618, 0.0
      %v667 = vmax.f32 %v623, 0.0
      %v668 = vmax.f32 %v626, 0.0
      %v669 = vmax.f32 %v631, 0.0
      %v670 = vmax.f32 %v634, 0.0
      %v671 = vmax.f32 %v639, 0.0
      %v672 = vmax.f32 %v642, 0.0
      %v673 = vmax.f32 %v647, 0.0
      %v674 = vmax.f32 %v650, 0.0
      %v675 = vmax.f32 %v655, 0.0
      %v676 = vmax.f32 %v658, 0.0
      %v677 = vpack.c.bf16 %v662, %v661
      %v678 = vpack.c.bf16 %v664, %v663
      %v679 = vpack.c.bf16 %v666, %v665
      %v680 = vpack.c.bf16 %v668, %v667
      %v681 = vpack.c.bf16 %v670, %v669
      %v682 = vpack.c.bf16 %v672, %v671
      %v683 = vpack.c.bf16 %v674, %v673
      %v684 = vpack.c.bf16 %v676, %v675
      %v685 = vld [vmem:[%s5] sm:$0xf]
      %v686 = vld [vmem:[%s5 + $0x4] sm:$0xf]
      %v687 = vld [vmem:[%s5 + $0x8] sm:$0xf]
      %v688 = vld [vmem:[%s5 + $0xc] sm:$0xf]
      %v689 = vld [vmem:[%s6] sm:$0x1]
      %v691 = vlaneseq
      %v692 = vshrl.u32 %v691, 7
      %v693 = vsub.s32 0, %v692
      %v694 = vrot.slane %v689, %v693
      %v700 = vunpack.c.l.b16 %v685
      %v701 = vunpack.c.l.b16 %v686
      %v702 = vunpack.c.l.b16 %v687
      %v703 = vunpack.c.l.b16 %v688
      %v704 = vpack.c.b16 %v701, %v700
      %v705 = vpack.c.b16 %v703, %v702
      %v709 = vsel %vm371, %v677, 0
      %v712 = vsel %vm371, %v678, 0
      %v715 = vsel %vm371, %v679, 0
      %v718 = vsel %vm371, %v680, 0
      %v721 = vsel %vm371, %v681, 0
      %v724 = vsel %vm371, %v682, 0
      %v727 = vsel %vm371, %v683, 0
      %v730 = vsel %vm371, %v684, 0
      %732 = vmatprep.subr.bf16.mxu0 0
      %733 = vmatpush1.bf16.msra.mxu0 %v704
      %734 = vmatprep.subr.bf16.mxu0 0
      %735 = vmatpush1.bf16.msra.mxu0 %v705
      %736 = vmatprep.subr.bf16.mxu0 0
      %737 = vmatpush1.bf16.msra.mxu0 0
      %738 = vmatprep.subr.bf16.mxu0 0
      %739 = vmatpush1.bf16.msra.mxu0 0
      %740 = vmatprep.subr.bf16.mxu0 0
      %741 = vmatpush1.bf16.msra.mxu0 0
      %742 = vmatprep.subr.bf16.mxu0 0
      %743 = vmatpush1.bf16.msra.mxu0 0
      %744 = vmatprep.subr.bf16.mxu0 0
      %745 = vmatpush1.bf16.msra.mxu0 0
      %746 = vmatprep.subr.bf16.mxu0 0
      %747 = vmatpush1.bf16.msra.mxu0 0
      %748 = vmatprep.subr.bf16.mxu0 0
      %749 = vmatpush1.bf16.msra.mxu0 0
      %750 = vmatprep.subr.bf16.mxu0 0
      %751 = vmatpush1.bf16.msra.mxu0 0
      %752 = vmatprep.subr.bf16.mxu0 0
      %753 = vmatpush1.bf16.msra.mxu0 0
      %754 = vmatprep.subr.bf16.mxu0 0
      %755 = vmatpush1.bf16.msra.mxu0 0
      %756 = vmatprep.subr.bf16.mxu0 0
      %757 = vmatpush1.bf16.msra.mxu0 0
      %758 = vmatprep.subr.bf16.mxu0 0
      %759 = vmatpush1.bf16.msra.mxu0 0
      %760 = vmatprep.subr.bf16.mxu0 0
      %761 = vmatpush1.bf16.msra.mxu0 0
      %762 = vmatprep.subr.bf16.mxu0 0
      %763 = vmatpush1.bf16.msra.mxu0 0
      %764 = vmatprep.mubr.bf16.mxu0 0
      %765 = vmatmul.mubr.bf16.gmra.mrb[0].mxu0 %v709
      %v766 = vpop.f32.mrb[0].mxu0
      %v767 = vadd.f32 %v694, %v766
      %v768 = vpop.f32.mrb[0].mxu0
      %v769 = vpop.f32.mrb[0].mxu0
      %v770 = vadd.f32 %v694, %v769
      %v771 = vpop.f32.mrb[0].mxu0
      %772 = vmatprep.mubr.bf16.mxu0 0
      %773 = vmatmul.mubr.bf16.gmra.mrb[0].mxu0 %v712
      %v774 = vpop.f32.mrb[0].mxu0
      %v775 = vadd.f32 %v694, %v774
      %v776 = vpop.f32.mrb[0].mxu0
      %v777 = vpop.f32.mrb[0].mxu0
      %v778 = vadd.f32 %v694, %v777
      %v779 = vpop.f32.mrb[0].mxu0
      %780 = vmatprep.mubr.bf16.mxu0 0
      %781 = vmatmul.mubr.bf16.gmra.mrb[0].mxu0 %v715
      %v782 = vpop.f32.mrb[0].mxu0
      %v783 = vadd.f32 %v694, %v782
      %v784 = vpop.f32.mrb[0].mxu0
      %v785 = vpop.f32.mrb[0].mxu0
      %v786 = vadd.f32 %v694, %v785
      %v787 = vpop.f32.mrb[0].mxu0
      %788 = vmatprep.mubr.bf16.mxu0 0
      %789 = vmatmul.mubr.bf16.gmra.mrb[0].mxu0 %v718
      %v790 = vpop.f32.mrb[0].mxu0
      %v791 = vadd.f32 %v694, %v790
      %v792 = vpop.f32.mrb[0].mxu0
      %v793 = vpop.f32.mrb[0].mxu0
      %v794 = vadd.f32 %v694, %v793
      %v795 = vpop.f32.mrb[0].mxu0
      %796 = vmatprep.mubr.bf16.mxu0 0
      %797 = vmatmul.mubr.bf16.gmra.mrb[0].mxu0 %v721
      %v798 = vpop.f32.mrb[0].mxu0
      %v799 = vadd.f32 %v694, %v798
      %v800 = vpop.f32.mrb[0].mxu0
      %v801 = vpop.f32.mrb[0].mxu0
      %v802 = vadd.f32 %v694, %v801
      %v803 = vpop.f32.mrb[0].mxu0
      %804 = vmatprep.mubr.bf16.mxu0 0
      %805 = vmatmul.mubr.bf16.gmra.mrb[0].mxu0 %v724
      %v806 = vpop.f32.mrb[0].mxu0
      %v807 = vadd.f32 %v694, %v806
      %v808 = vpop.f32.mrb[0].mxu0
      %v809 = vpop.f32.mrb[0].mxu0
      %v810 = vadd.f32 %v694, %v809
      %v811 = vpop.f32.mrb[0].mxu0
      %812 = vmatprep.mubr.bf16.mxu0 0
      %813 = vmatmul.mubr.bf16.gmra.mrb[0].mxu0 %v727
      %v814 = vpop.f32.mrb[0].mxu0
      %v815 = vadd.f32 %v694, %v814
      %v816 = vpop.f32.mrb[0].mxu0
      %v817 = vpop.f32.mrb[0].mxu0
      %v818 = vadd.f32 %v694, %v817
      %v819 = vpop.f32.mrb[0].mxu0
      %820 = vmatprep.mubr.bf16.mxu0 0
      %821 = vmatmul.mubr.bf16.gmra.mrb[0].mxu0 %v730
      %v822 = vpop.f32.mrb[0].mxu0
      %v823 = vadd.f32 %v694, %v822
      %v824 = vpop.f32.mrb[0].mxu0
      %v825 = vpop.f32.mrb[0].mxu0
      %v826 = vadd.f32 %v694, %v825
      %v827 = vpop.f32.mrb[0].mxu0
      %828 = vdwg.mxu0
      %v829 = vxor.u32 %v767, 2147483648
      %v830 = vxor.u32 %v770, 2147483648
      %v831 = vxor.u32 %v775, 2147483648
      %v832 = vxor.u32 %v778, 2147483648
      %v833 = vxor.u32 %v783, 2147483648
      %v834 = vxor.u32 %v786, 2147483648
      %v835 = vxor.u32 %v791, 2147483648
      %v836 = vxor.u32 %v794, 2147483648
      %v837 = vxor.u32 %v799, 2147483648
      %v838 = vxor.u32 %v802, 2147483648
      %v839 = vxor.u32 %v807, 2147483648
      %v840 = vxor.u32 %v810, 2147483648
      %v841 = vxor.u32 %v815, 2147483648
      %v842 = vxor.u32 %v818, 2147483648
      %v843 = vxor.u32 %v823, 2147483648
      %v844 = vxor.u32 %v826, 2147483648
      %v845 = vmul.f32 %v829, 1.442695
      %v846 = vpow.pop %v845
      %v847 = vmul.f32 %v830, 1.442695
      %v848 = vpow.pop %v847
      %v849 = vmul.f32 %v831, 1.442695
      %v850 = vpow.pop %v849
      %v851 = vmul.f32 %v832, 1.442695
      %v852 = vpow.pop %v851
      %v853 = vmul.f32 %v833, 1.442695
      %v854 = vpow.pop %v853
      %v855 = vmul.f32 %v834, 1.442695
      %v856 = vpow.pop %v855
      %v857 = vmul.f32 %v835, 1.442695
      %v858 = vpow.pop %v857
      %v859 = vmul.f32 %v836, 1.442695
      %v860 = vpow.pop %v859
      %v861 = vmul.f32 %v837, 1.442695
      %v862 = vpow.pop %v861
      %v863 = vmul.f32 %v838, 1.442695
      %v864 = vpow.pop %v863
      %v865 = vmul.f32 %v839, 1.442695
      %v866 = vpow.pop %v865
      %v867 = vmul.f32 %v840, 1.442695
      %v868 = vpow.pop %v867
      %v869 = vmul.f32 %v841, 1.442695
      %v870 = vpow.pop %v869
      %v871 = vmul.f32 %v842, 1.442695
      %v872 = vpow.pop %v871
      %v873 = vmul.f32 %v843, 1.442695
      %v874 = vpow.pop %v873
      %v875 = vmul.f32 %v844, 1.442695
      %v876 = vpow.pop %v875
      %v877 = vadd.f32 %v846, 1.0
      %v878 = vadd.f32 %v848, 1.0
      %v879 = vadd.f32 %v850, 1.0
      %v880 = vadd.f32 %v852, 1.0
      %v881 = vadd.f32 %v854, 1.0
      %v882 = vadd.f32 %v856, 1.0
      %v883 = vadd.f32 %v858, 1.0
      %v884 = vadd.f32 %v860, 1.0
      %v885 = vadd.f32 %v862, 1.0
      %v886 = vadd.f32 %v864, 1.0
      %v887 = vadd.f32 %v866, 1.0
      %v888 = vadd.f32 %v868, 1.0
      %v889 = vadd.f32 %v870, 1.0
      %v890 = vadd.f32 %v872, 1.0
      %v891 = vadd.f32 %v874, 1.0
      %v892 = vadd.f32 %v876, 1.0
      %v893 = vrcp.pop %v877
      %v894 = vmul.f32 1.0, %v893
      %v895 = vrcp.pop %v878
      %v896 = vmul.f32 1.0, %v895
      %v897 = vrcp.pop %v879
      %v898 = vmul.f32 1.0, %v897
      %v899 = vrcp.pop %v880
      %v900 = vmul.f32 1.0, %v899
      %v901 = vrcp.pop %v881
      %v902 = vmul.f32 1.0, %v901
      %v903 = vrcp.pop %v882
      %v904 = vmul.f32 1.0, %v903
      %v905 = vrcp.pop %v883
      %v906 = vmul.f32 1.0, %v905
      %v907 = vrcp.pop %v884
      %v908 = vmul.f32 1.0, %v907
      %v909 = vrcp.pop %v885
      %v910 = vmul.f32 1.0, %v909
      %v911 = vrcp.pop %v886
      %v912 = vmul.f32 1.0, %v911
      %v913 = vrcp.pop %v887
      %v914 = vmul.f32 1.0, %v913
      %v915 = vrcp.pop %v888
      %v916 = vmul.f32 1.0, %v915
      %v917 = vrcp.pop %v889
      %v918 = vmul.f32 1.0, %v917
      %v919 = vrcp.pop %v890
      %v920 = vmul.f32 1.0, %v919
      %v921 = vrcp.pop %v891
      %v922 = vmul.f32 1.0, %v921
      %v923 = vrcp.pop %v892
      %v924 = vmul.f32 1.0, %v923
      %vm925 = vcmask 64512
      %926 = vst.msk [vmem:[%s315] sm:$0xff] %vm925, %v894
      %927 = vst.msk [vmem:[%s315 + $0x8] sm:$0xff] %vm925, %v896
      %928 = vst.msk [vmem:[%s315 + $0x10] sm:$0xff] %vm925, %v898
      %929 = vst.msk [vmem:[%s315 + $0x18] sm:$0xff] %vm925, %v900
      %930 = vst.msk [vmem:[%s315 + $0x20] sm:$0xff] %vm925, %v902
      %931 = vst.msk [vmem:[%s315 + $0x28] sm:$0xff] %vm925, %v904
      %932 = vst.msk [vmem:[%s315 + $0x30] sm:$0xff] %vm925, %v906
      %933 = vst.msk [vmem:[%s315 + $0x38] sm:$0xff] %vm925, %v908
      %934 = vst.msk [vmem:[%s315 + $0x40] sm:$0xff] %vm925, %v910
      %935 = vst.msk [vmem:[%s315 + $0x48] sm:$0xff] %vm925, %v912
      %936 = vst.msk [vmem:[%s315 + $0x50] sm:$0xff] %vm925, %v914
      %937 = vst.msk [vmem:[%s315 + $0x58] sm:$0xff] %vm925, %v916
      %938 = vst.msk [vmem:[%s315 + $0x60] sm:$0xff] %vm925, %v918
      %939 = vst.msk [vmem:[%s315 + $0x68] sm:$0xff] %vm925, %v920
      %940 = vst.msk [vmem:[%s315 + $0x70] sm:$0xff] %vm925, %v922
      %941 = vst.msk [vmem:[%s315 + $0x78] sm:$0xff] %vm925, %v924
      %v942 = vmax.f32 %v767, 0.0
      %v943 = vmax.f32 %v770, 0.0
      %v944 = vmax.f32 %v775, 0.0
      %v945 = vmax.f32 %v778, 0.0
      %v946 = vmax.f32 %v783, 0.0
      %v947 = vmax.f32 %v786, 0.0
      %v948 = vmax.f32 %v791, 0.0
      %v949 = vmax.f32 %v794, 0.0
      %v950 = vmax.f32 %v799, 0.0
      %v951 = vmax.f32 %v802, 0.0
      %v952 = vmax.f32 %v807, 0.0
      %v953 = vmax.f32 %v810, 0.0
      %v954 = vmax.f32 %v815, 0.0
      %v955 = vmax.f32 %v818, 0.0
      %v956 = vmax.f32 %v823, 0.0
      %v957 = vmax.f32 %v826, 0.0
      %974 = vrot.lane.b32.xlu0 %v942, 120
      %v975 = vpop.permute.xlu0 %974
      %976 = vrot.lane.b32.xlu0 %v943, 120
      %v977 = vpop.permute.xlu0 %976
      %978 = vrot.lane.b32.xlu0 %v944, 120
      %v979 = vpop.permute.xlu0 %978
      %980 = vrot.lane.b32.xlu0 %v945, 120
      %v981 = vpop.permute.xlu0 %980
      %982 = vrot.lane.b32.xlu0 %v946, 120
      %v983 = vpop.permute.xlu0 %982
      %984 = vrot.lane.b32.xlu0 %v947, 120
      %v985 = vpop.permute.xlu0 %984
      %986 = vrot.lane.b32.xlu0 %v948, 120
      %v987 = vpop.permute.xlu0 %986
      %988 = vrot.lane.b32.xlu0 %v949, 120
      %v989 = vpop.permute.xlu0 %988
      %990 = vrot.lane.b32.xlu0 %v950, 120
      %v991 = vpop.permute.xlu0 %990
      %992 = vrot.lane.b32.xlu0 %v951, 120
      %v993 = vpop.permute.xlu0 %992
      %994 = vrot.lane.b32.xlu0 %v952, 120
      %v995 = vpop.permute.xlu0 %994
      %996 = vrot.lane.b32.xlu0 %v953, 120
      %v997 = vpop.permute.xlu0 %996
      %998 = vrot.lane.b32.xlu0 %v954, 120
      %v999 = vpop.permute.xlu0 %998
      %1000 = vrot.lane.b32.xlu0 %v955, 120
      %v1001 = vpop.permute.xlu0 %1000
      %1002 = vrot.lane.b32.xlu0 %v956, 120
      %v1003 = vpop.permute.xlu0 %1002
      %1004 = vrot.lane.b32.xlu0 %v957, 120
      %v1005 = vpop.permute.xlu0 %1004
      %vm1022 = vcmask 7168
      %1023 = vst.msk [vmem:[%s321] sm:$0xff] %vm1022, %v975
      %1024 = vst.msk [vmem:[%s321 + $0x8] sm:$0xff] %vm1022, %v977
      %1025 = vst.msk [vmem:[%s321 + $0x10] sm:$0xff] %vm1022, %v979
      %1026 = vst.msk [vmem:[%s321 + $0x18] sm:$0xff] %vm1022, %v981
      %1027 = vst.msk [vmem:[%s321 + $0x20] sm:$0xff] %vm1022, %v983
      %1028 = vst.msk [vmem:[%s321 + $0x28] sm:$0xff] %vm1022, %v985
      %1029 = vst.msk [vmem:[%s321 + $0x30] sm:$0xff] %vm1022, %v987
      %1030 = vst.msk [vmem:[%s321 + $0x38] sm:$0xff] %vm1022, %v989
      %1031 = vst.msk [vmem:[%s321 + $0x40] sm:$0xff] %vm1022, %v991
      %1032 = vst.msk [vmem:[%s321 + $0x48] sm:$0xff] %vm1022, %v993
      %1033 = vst.msk [vmem:[%s321 + $0x50] sm:$0xff] %vm1022, %v995
      %1034 = vst.msk [vmem:[%s321 + $0x58] sm:$0xff] %vm1022, %v997
      %1035 = vst.msk [vmem:[%s321 + $0x60] sm:$0xff] %vm1022, %v999
      %1036 = vst.msk [vmem:[%s321 + $0x68] sm:$0xff] %vm1022, %v1001
      %1037 = vst.msk [vmem:[%s321 + $0x70] sm:$0xff] %vm1022, %v1003
      %1038 = vst.msk [vmem:[%s321 + $0x78] sm:$0xff] %vm1022, %v1005
      %s1039 = smul.u32 16, %s20
      %p1040 = scmp.lt.s32.totalorder %s1039, 31
      %s1041 = scalar_select %p1040, %s1039, 31
      %s1042 = smul.addr %s1041, 8
      %s1043 = scalar_lea.vmem %s7, %s1042
      %s1044 = smul.u32 16, %s20
      %p1045 = scmp.lt.s32.totalorder %s1044, 31
      %s1046 = scalar_select %p1045, %s1044, 31
      %s1047 = smul.addr %s1046, 8
      %s1048 = scalar_lea.vmem %s8, %s1047
      // Predicated region
      $region49: #{dann_discriminator_forward.1} parent=47 // pred_check
        %p1049 = pneg %p190
      $region50: #{dann_discriminator_forward.1} parent=47 // pred_check_branch
        %1051 = sbr.rel (%p1049) target = $region52
      $region51: #{dann_discriminator_forward.1} parent=47 // pred_region
        %s1052 = smul.u32 16, %s20
      $region52: #{dann_discriminator_forward.1} parent=47 // pred_fallthru
        _
      // Predicated region
      $region53: #{dann_discriminator_forward.1} parent=47 // pred_check
        %p1053 = pneg %p216
      $region54: #{dann_discriminator_forward.1} parent=47 // pred_check_branch
        %1055 = sbr.rel (%p1053) target = $region56
      $region55: #{dann_discriminator_forward.1} parent=47 // pred_region
        %s1056 = smul.u32 16, %s20
      $region56: #{dann_discriminator_forward.1} parent=47 // pred_fallthru
        _
    $region48: #{dann_discriminator_forward.1} parent=5 // pred_fallthru
      _
    %p1057 = scmp.le.s32.totalorder 2, %s15
    // Predicated region
    $region57: #{dann_discriminator_forward.1} parent=5 // pred_check
      %p1058 = pneg %p1057
    $region58: #{dann_discriminator_forward.1} parent=5 // pred_check_branch
      %1060 = sbr.rel (%p1058) target = $region60
    $region59: #{dann_discriminator_forward.1} parent=5 // pred_region
      %s1061 = ssub.s32 %s15, 2
      // Predicated region
      $region61: #{dann_discriminator_forward.1} parent=59 // pred_check
        %p1062 = pneg %p196
      $region62: #{dann_discriminator_forward.1} parent=59 // pred_check_branch
        %1064 = sbr.rel (%p1062) target = $region64
      $region63: #{dann_discriminator_forward.1} parent=59 // pred_region
        %s1065 = smul.u32 16, %s21
        %p1066 = scmp.lt.s32.totalorder %s1065, 31
        %s1067 = scalar_select %p1066, %s1065, 31
        %s1068 = smul.addr %s1067, 8
        %s1069 = scalar_lea.vmem %s7, %s1068
      $region64: #{dann_discriminator_forward.1} parent=59 // pred_fallthru
        _
      // Predicated region
      $region65: #{dann_discriminator_forward.1} parent=59 // pred_check
        %p1070 = pneg %p222
      $region66: #{dann_discriminator_forward.1} parent=59 // pred_check_branch
        %1072 = sbr.rel (%p1070) target = $region68
      $region67: #{dann_discriminator_forward.1} parent=59 // pred_region
        %s1073 = smul.u32 16, %s21
        %p1074 = scmp.lt.s32.totalorder %s1073, 31
        %s1075 = scalar_select %p1074, %s1073, 31
        %s1076 = smul.addr %s1075, 8
        %s1077 = scalar_lea.vmem %s8, %s1076
      $region68: #{dann_discriminator_forward.1} parent=59 // pred_fallthru
        _
    $region60: #{dann_discriminator_forward.1} parent=5 // pred_fallthru
      _
  $region6: #{dann_discriminator_forward.1} parent=0 // loop_footer
    %s19 = sadd.s32 1, %s15
  $region7: #{dann_discriminator_forward.1} parent=0 // loop_footer_branch
    %14 = sbr.rel target = $region3
  $region8: #{dann_discriminator_forward.1} parent=0 // loop_exit
    _

</llo_original>
